<compile_context>
chip_gen: v5e
topology: v5e:2x2
jax: 0.10.0
libtpu: 0.0.40
codegen_flags: <defaults>
</compile_context>

<pallas_src>
import functools

import jax
import jax.numpy as jnp
from jax.experimental import pallas as pl
from jax.experimental.pallas import tpu as pltpu

_LN_EPS = 1e-5  # torch.nn.LayerNorm default


def _round_up(x, m):
    return (x + m - 1) // m * m


def _layer_norm(x, eps=_LN_EPS):
    # x: (B, F); elementwise_affine=False -> no scale / bias
    mu = jnp.mean(x, axis=-1, keepdims=True)
    xc = x - mu
    var = jnp.mean(xc * xc, axis=-1, keepdims=True)
    return xc * jax.lax.rsqrt(var + eps)


def _graph_pooler_kernel(keep_ref, mask_ref, node_ref, edge_ref, out_ref, acc_ref,
                         *, n_pairs, has_pair_tail, mm_precision):
    # keep_ref : (B, n_node)           f32, 1.0 = valid node (resident across p)
    # mask_ref : (1, B, 1, p_tile)     edge dtype, keep_i*keep_j for this pair tile
    #                                  (zeros at padded / invalid pair positions)
    # node_ref : (n_node, B, node_sz)  native dtype (resident across p)
    # edge_ref : (B, p_tile, edge_sz)  native dtype
    # out_ref  : (B, node_sz+edge_sz)
    # acc_ref  : (B, 1, edge_sz)       f32 scratch accumulator
    p = pl.program_id(1)
    last_p = pl.num_programs(1) - 1

    @pl.when(p == 0)
    def _init():
        acc_ref[...] = jnp.zeros(acc_ref.shape, acc_ref.dtype)

    e = edge_ref[...]                               # (B, p_tile, E), native dtype
    if has_pair_tail:
        # Only traced when n_node**2 % p_tile != 0: zero the (possibly garbage)
        # out-of-range tail of the last pair tile so 0-weights cannot turn
        # non-finite garbage into NaN inside the MXU accumulation.
        p_tile = e.shape[1]
        pair_ids = p * p_tile + jax.lax.broadcasted_iota(jnp.int32, (p_tile, 1), 0)
        e = jnp.where((pair_ids < n_pairs)[None, :, :], e, jnp.zeros_like(e))

    # Masked partial sum over this pair tile on the MXU, accumulated in f32.
    w = mask_ref[0]                                 # (B, 1, p_tile), edge dtype
    acc_ref[...] += jnp.einsum('bqp,bpe->bqe', w, e,
                               preferred_element_type=jnp.float32,
                               precision=mm_precision)

    @pl.when(p == last_p)
    def _finalize():
        keep = keep_ref[...]                                     # (B, n_node) f32
        n_valid = jnp.sum(keep, axis=-1, keepdims=True)          # (B, 1)
        # LayerNorm is scale invariant -> approx (EUP) reciprocal error cancels.
        inv_n = pl.reciprocal(n_valid, approx=True)
        inv_pair = pl.reciprocal(n_valid * n_valid, approx=True)

        # Node pooling: tiny vs. edge -> VPU multiply + reduce, once per batch block,
        # node kept in its native (n_node, B, F) layout (no wrapper transpose/copy).
        node_f = node_ref[...].astype(jnp.float32)               # (n_node, B, Fn)
        keep_t = jnp.transpose(keep)                             # (n_node, B)
        node_mean = jnp.sum(node_f * keep_t[:, :, None], axis=0) * inv_n

        edge_mean = acc_ref[...][:, 0, :] * inv_pair             # (B, E)

        # Single fused lane-dense store of the concatenated, LayerNorm'd features.
        out = jnp.concatenate([_layer_norm(node_mean), _layer_norm(edge_mean)],
                              axis=-1)
        out_ref[...] = out.astype(out_ref.dtype)


def _padded_block_bytes(block_shape, dtype):
    """VMEM footprint of one block buffer incl. (sublane, lane) padding."""
    itemsize = jnp.dtype(dtype).itemsize
    sub = 8 * max(1, 4 // itemsize)          # sublane quantum (packed dtypes)
    dims = list(block_shape)
    dims[-1] = _round_up(dims[-1], 128)
    if len(dims) >= 2:
        dims[-2] = _round_up(dims[-2], sub)
    n = 1
    for d in dims:
        n *= d
    return n * itemsize


def _plan(batch, n_node, node_size, edge_size, node_dtype, edge_dtype, out_dtype,
          max_tile_bytes):
    # ---- batch tiling: b_tile multiple of 8 (sublane rule); pad only the small
    #      per-batch arrays so the parallel batch axis has >=2 blocks when batch > 8.
    if batch > 8:
        b_tile = 8
        batch_pad = _round_up(batch, 8)
    else:
        b_tile = batch
        batch_pad = batch
    grid_b = batch_pad // b_tile

    # ---- VMEM budget, generation aware (v5e/v6e: 128 MiB, v7x: 64 MiB per core)
    try:
        vmem_cap = int(pltpu.get_tpu_info().vmem_capacity_bytes)
    except Exception:
        vmem_cap = 64 * 1024 * 1024          # conservative fallback (v7x per core)
    budget = (3 * vmem_cap) // 4             # leave 25% headroom
    if max_tile_bytes is None:
        big = 16 * 1024 * 1024 if vmem_cap >= 128 * 1024 * 1024 else 12 * 1024 * 1024
        per_buf_cap = min(big, budget // 4)  # double-buffered edge <= budget/2
    else:
        per_buf_cap = max_tile_bytes         # test / tuning override

    # ---- pair-axis tiling against the *padded* edge-tile footprint
    edge_itemsize = jnp.dtype(edge_dtype).itemsize
    sub_e = 8 * max(1, 4 // edge_itemsize)
    e_pad = _round_up(edge_size, 128)
    bytes_per_pair_row = b_tile * e_pad * edge_itemsize
    max_p = max(sub_e, (per_buf_cap // bytes_per_pair_row) // sub_e * sub_e)

    n_pairs = n_node * n_node
    if n_pairs <= max_p:
        p_tile, grid_p, has_tail = n_pairs, 1, False
    else:
        divisors = [d for d in range(sub_e, max_p + 1, sub_e) if n_pairs % d == 0]
        if divisors:
            p_tile, has_tail = max(divisors), False
        else:
            p_tile, has_tail = max_p, True   # tail block neutralized in-kernel
        grid_p = -(-n_pairs // p_tile)

    # ---- total resident VMEM estimate (padded, double-buffered) -> vmem limit
    f_total = node_size + edge_size
    est = (2 * _padded_block_bytes((b_tile, p_tile, edge_size), edge_dtype)     # edge
           + 2 * _padded_block_bytes((1, b_tile, 1, p_tile), edge_dtype)        # pair mask
           + 2 * _padded_block_bytes((n_node, b_tile, node_size), node_dtype)   # node
           + 2 * _padded_block_bytes((b_tile, n_node), jnp.float32)             # keep
           + 2 * _padded_block_bytes((b_tile, f_total), out_dtype)              # out
           + _padded_block_bytes((b_tile, 1, edge_size), jnp.float32))          # acc
    vmem_limit = min(int(vmem_cap * 0.85),
                     max(32 * 1024 * 1024, est + 8 * 1024 * 1024))

    return b_tile, batch_pad, grid_b, p_tile, grid_p, has_tail, vmem_limit


def graph_pooler(node, edge, padding_mask, *, max_tile_bytes=None,
                 matmul_precision=None):
    """node: [n_node, batch, node_size]; edge: [batch, n_node, n_node, edge_size];
    padding_mask: bool [batch, n_node]. Returns [batch, node_size + edge_size]."""
    n_node, batch, node_size = node.shape
    edge_size = edge.shape[-1]
    n_pairs = n_node * n_node
    out_dtype = jnp.result_type(node.dtype, edge.dtype)
    f_total = node_size + edge_size

    (b_tile, batch_pad, grid_b, p_tile, grid_p, has_tail, vmem_limit) = _plan(
        batch, n_node, node_size, edge_size, node.dtype, edge.dtype, out_dtype,
        max_tile_bytes)

    # --- tiny wrapper-side tensors only; edge / node stay in native dtype & layout,
    #     the edge reshape below is contiguous (metadata only).
    keep = jnp.logical_not(padding_mask).astype(jnp.float32)        # (batch, n_node)
    if batch_pad > batch:
        keep = jnp.pad(keep, ((0, batch_pad - batch), (0, 0)))      # padded rows -> 0

    # Pair-weight mask keep_i*keep_j, flattened and zero-padded to grid_p*p_tile,
    # pre-laid-out as (grid_p, batch_pad, 1, p_tile) and streamed with the same
    # index map as edge: ~1/edge_size extra HBM traffic, zero per-step weight
    # construction / relayout inside the kernel, and it handles pair-axis tails
    # and padded batch rows for free (their weights are exactly zero).
    pair = (keep[:, :, None] * keep[:, None, :]).reshape(batch_pad, n_pairs)
    p_total = grid_p * p_tile
    if p_total > n_pairs:
        pair = jnp.pad(pair, ((0, 0), (0, p_total - n_pairs)))
    pair_mask = pair.reshape(batch_pad, grid_p, p_tile).transpose(1, 0, 2)
    pair_mask = pair_mask[:, :, None, :].astype(edge.dtype)
    # TODO(synk): for integer edge dtypes on v7x (no int MXU) stream the mask in
    # bf16 and upcast the edge tile in-kernel instead.

    edge3 = edge.reshape(batch, n_pairs, edge_size)                 # (batch, P, E)

    kernel = functools.partial(_graph_pooler_kernel, n_pairs=n_pairs,
                               has_pair_tail=has_tail,
                               mm_precision=matmul_precision)

    out = pl.pallas_call(
        kernel,
        out_shape=jax.ShapeDtypeStruct((batch_pad, f_total), out_dtype),
        grid_spec=pltpu.PrefetchScalarGridSpec(
            num_scalar_prefetch=0,
            grid=(grid_b, grid_p),
            in_specs=[
                # full keep mask for this batch block (resident across pair tiles)
                pl.BlockSpec((b_tile, n_node), lambda b, p: (b, 0)),
                # precomputed pair weights for pair tile p (same streaming as edge)
                pl.BlockSpec((1, b_tile, 1, p_tile), lambda b, p: (p, b, 0, 0)),
                # node in native layout; block index independent of p -> resident
                pl.BlockSpec((n_node, b_tile, node_size), lambda b, p: (0, b, 0)),
                # edge pair tile, native dtype (dominant HBM stream)
                pl.BlockSpec((b_tile, p_tile, edge_size), lambda b, p: (b, p, 0)),
            ],
            out_specs=pl.BlockSpec((b_tile, f_total), lambda b, p: (b, 0)),
            scratch_shapes=[pltpu.VMEM((b_tile, 1, edge_size), jnp.float32)],
        ),
        compiler_params=pltpu.CompilerParams(
            dimension_semantics=("parallel", "arbitrary"),
            vmem_limit_bytes=vmem_limit,
        ),
    )(keep, pair_mask, node, edge3)

    return out[:batch] if batch_pad > batch else out


def graph_pooler_ref(node, edge, padding_mask):
    """Pure-JAX reference mirroring the PyTorch forward exactly."""
    n_node = node.shape[0]
    npm = jnp.transpose(padding_mask)[:, :, None]                   # (n_node, batch, 1)
    node_m = jnp.where(npm, 0.0, node.astype(jnp.float32))
    node_mean = jnp.sum(node_m, axis=0) / (n_node - jnp.sum(npm, axis=0))
    epm = (padding_mask[:, :, None] | padding_mask[:, None, :])[..., None]
    edge_m = jnp.where(epm, 0.0, edge.astype(jnp.float32))
    edge_mean = jnp.sum(edge_m, axis=(1, 2)) / (n_node ** 2 - jnp.sum(epm, axis=(1, 2)))

    def ln(x):
        mu = jnp.mean(x, axis=-1, keepdims=True)
        var = jnp.mean((x - mu) ** 2, axis=-1, keepdims=True)
        return (x - mu) / jnp.sqrt(var + _LN_EPS)

    return jnp.concatenate([ln(node_mean), ln(edge_mean)], axis=-1)


if __name__ == "__main__":
    key = jax.random.PRNGKey(0)
    k1, k2 = jax.random.split(key)

    # --- Test 1: tiny config, everything in one tile ---
    n_node, batch, node_size, edge_size = 8, 4, 32, 32
    node = jax.random.normal(k1, (n_node, batch, node_size), dtype=jnp.float32)
    edge = jax.random.normal(k2, (batch, n_node, n_node, edge_size), dtype=jnp.float32)
    lengths = jnp.array([8, 5, 3, 7], dtype=jnp.int32)
    padding_mask = jnp.arange(n_node)[None, :] >= lengths[:, None]

    out = graph_pooler(node, edge, padding_mask)
    jax.block_until_ready(out)
    ref = graph_pooler_ref(node, edge, padding_mask)
    assert out.shape == (batch, node_size + edge_size)
    assert jnp.allclose(out, ref, atol=1e-4, rtol=1e-4), "test 1 mismatch vs reference"

    # --- Test 2: tiled pair reduction (4 pair tiles) + 2 batch blocks ---
    k3, k4 = jax.random.split(k2)
    n_node, batch, node_size, edge_size = 16, 16, 32, 64
    node = jax.random.normal(k3, (n_node, batch, node_size), dtype=jnp.float32)
    edge = jax.random.normal(k4, (batch, n_node, n_node, edge_size), dtype=jnp.float32)
    lengths = (jnp.arange(batch, dtype=jnp.int32) % n_node) + 1
    padding_mask = jnp.arange(n_node)[None, :] >= lengths[:, None]

    out = graph_pooler(node, edge, padding_mask, max_tile_bytes=256 * 1024)
    jax.block_until_ready(out)
    ref = graph_pooler_ref(node, edge, padding_mask)
    assert out.shape == (batch, node_size + edge_size)
    assert jnp.allclose(out, ref, atol=1e-4, rtol=1e-4), "test 2 mismatch vs reference"

    # --- Test 3: awkward shapes -> batch padding (9 -> 16, 2 parallel blocks) and
    #     a partial last pair tile (n_node^2 = 100 tiled by 32, tail masked) ---
    k5, k6 = jax.random.split(k4)
    n_node, batch, node_size, edge_size = 10, 9, 16, 24
    node = jax.random.normal(k5, (n_node, batch, node_size), dtype=jnp.float32)
    edge = jax.random.normal(k6, (batch, n_node, n_node, edge_size), dtype=jnp.float32)
    lengths = (jnp.arange(batch, dtype=jnp.int32) % n_node) + 1
    padding_mask = jnp.arange(n_node)[None, :] >= lengths[:, None]

    out = graph_pooler(node, edge, padding_mask, max_tile_bytes=128 * 1024)
    jax.block_until_ready(out)
    ref = graph_pooler_ref(node, edge, padding_mask)
    assert out.shape == (batch, node_size + edge_size)
    assert jnp.allclose(out, ref, atol=1e-4, rtol=1e-4), "test 3 mismatch vs reference"

    print("KERNEL_OK")
</pallas_src>

<mosaic_0001>
module attributes {stable_mosaic.version = 11 : i64} {
  func.func @_graph_pooler_kernel(%arg0: i32, %arg1: i32, %arg2: memref<4x8xf32, #tpu.memory_space<vmem>>, %arg3: memref<1x4x1x64xf32, #tpu.memory_space<vmem>>, %arg4: memref<8x4x32xf32, #tpu.memory_space<vmem>>, %arg5: memref<4x64x32xf32, #tpu.memory_space<vmem>>, %arg6: memref<4x64xf32, #tpu.memory_space<vmem>>, %arg7: memref<4x1x32xf32, #tpu.memory_space<vmem>>) attributes {dimension_semantics = [#tpu.dimension_semantics<parallel>, #tpu.dimension_semantics<arbitrary>], iteration_bounds = array<i64: 1, 1>, scalar_prefetch = 0 : i64, scratch_operands = 1 : i64, tpu.core_type = #tpu.core_type<tc>, window_params = [{transform_indices = @transform_0, window_bounds = array<i64: 4, 8>}, {transform_indices = @transform_1, window_bounds = array<i64: 1, 4, 1, 64>}, {transform_indices = @transform_2, window_bounds = array<i64: 8, 4, 32>}, {transform_indices = @transform_3, window_bounds = array<i64: 4, 64, 32>}, {transform_indices = @transform_4, window_bounds = array<i64: 4, 64>}]} {
    %c0_i32 = arith.constant 0 : i32
    %0 = arith.cmpi eq, %arg1, %c0_i32 : i32
    %1 = arith.extui %0 : i1 to i32
    %c0_i32_0 = arith.constant 0 : i32
    %2 = arith.cmpi ne, %1, %c0_i32_0 : i32
    scf.if %2 {
      %cst_15 = arith.constant 0.000000e+00 : f32
      %13 = vector.broadcast %cst_15 : f32 to vector<4x1x32xf32>
      %c0_16 = arith.constant 0 : index
      %c0_17 = arith.constant 0 : index
      %c0_18 = arith.constant 0 : index
      %14 = vector.load %arg7[%c0_16, %c0_17, %c0_18] : memref<4x1x32xf32, #tpu.memory_space<vmem>>, vector<4x1x32xf32>
      tpu.vector_store %arg7[%c0_16, %c0_17, %c0_18], %13 {strides = array<i32>} : memref<4x1x32xf32, #tpu.memory_space<vmem>>, vector<4x1x32xf32>,
    } else {
    }
    %c0 = arith.constant 0 : index
    %c0_1 = arith.constant 0 : index
    %c0_2 = arith.constant 0 : index
    %3 = vector.load %arg5[%c0, %c0_1, %c0_2] : memref<4x64x32xf32, #tpu.memory_space<vmem>>, vector<4x64x32xf32>
    %c0_3 = arith.constant 0 : index
    %c0_4 = arith.constant 0 : index
    %c0_5 = arith.constant 0 : index
    %c0_6 = arith.constant 0 : index
    %4 = vector.load %arg3[%c0_3, %c0_4, %c0_5, %c0_6] : memref<1x4x1x64xf32, #tpu.memory_space<vmem>>, vector<1x4x1x64xf32>
    %5 = vector.shape_cast %4 : vector<1x4x1x64xf32> to vector<4x1x64xf32>
    %c0_7 = arith.constant 0 : index
    %c0_8 = arith.constant 0 : index
    %c0_9 = arith.constant 0 : index
    %6 = vector.load %arg7[%c0_7, %c0_8, %c0_9] : memref<4x1x32xf32, #tpu.memory_space<vmem>>, vector<4x1x32xf32>
    "tpu.trace_start"() <{level = 10 : i32, message = "bqp,bpe->bqe"}> : () -> ()
    %cst = arith.constant dense<0.000000e+00> : vector<4x1x32xf32>
    %7 = tpu.matmul %5, %3, %cst {dimension_numbers = #tpu.dot_dimension_numbers<[2], [1], [1], [2], [0, 0, 0, 1, 1, 2], [0], [0]>} : vector<4x1x64xf32>, vector<4x64x32xf32>, vector<4x1x32xf32> -> vector<4x1x32xf32>
    "tpu.trace_stop"() : () -> ()
    %8 = arith.addf %6, %7 : vector<4x1x32xf32>
    %c0_10 = arith.constant 0 : index
    %c0_11 = arith.constant 0 : index
    %c0_12 = arith.constant 0 : index
    %9 = vector.load %arg7[%c0_10, %c0_11, %c0_12] : memref<4x1x32xf32, #tpu.memory_space<vmem>>, vector<4x1x32xf32>
    tpu.vector_store %arg7[%c0_10, %c0_11, %c0_12], %8 {strides = array<i32>} : memref<4x1x32xf32, #tpu.memory_space<vmem>>, vector<4x1x32xf32>,
    %c0_i32_13 = arith.constant 0 : i32
    %10 = arith.cmpi eq, %arg1, %c0_i32_13 : i32
    %11 = arith.extui %10 : i1 to i32
    %c0_i32_14 = arith.constant 0 : i32
    %12 = arith.cmpi ne, %11, %c0_i32_14 : i32
    scf.if %12 {
      %c0_15 = arith.constant 0 : index
      %c0_16 = arith.constant 0 : index
      %13 = vector.load %arg2[%c0_15, %c0_16] : memref<4x8xf32, #tpu.memory_space<vmem>>, vector<4x8xf32>
      %cst_17 = arith.constant dense<0.000000e+00> : vector<4xf32>
      %14 = vector.multi_reduction <add>, %13, %cst_17 [1] : vector<4x8xf32> to vector<4xf32>
      %15 = vector.shape_cast %14 : vector<4xf32> to vector<4x1xf32>
      %16 = tpu.reciprocal %15 {approx = true} : vector<4x1xf32> -> vector<4x1xf32>
      %17 = arith.mulf %15, %15 : vector<4x1xf32>
      %18 = tpu.reciprocal %17 {approx = true} : vector<4x1xf32> -> vector<4x1xf32>
      %c0_18 = arith.constant 0 : index
      %c0_19 = arith.constant 0 : index
      %c0_20 = arith.constant 0 : index
      %19 = vector.load %arg4[%c0_18, %c0_19, %c0_20] : memref<8x4x32xf32, #tpu.memory_space<vmem>>, vector<8x4x32xf32>
      %20 = tpu.transpose %13, [1, 0] : vector<4x8xf32> -> vector<8x4xf32>
      %21 = vector.shape_cast %20 : vector<8x4xf32> to vector<8x4x1xf32>
      %22 = vector.broadcast %21 : vector<8x4x1xf32> to vector<8x4x32xf32>
      %23 = arith.mulf %19, %22 : vector<8x4x32xf32>
      %cst_21 = arith.constant dense<0.000000e+00> : vector<4x32xf32>
      %24 = vector.multi_reduction <add>, %23, %cst_21 [0] : vector<8x4x32xf32> to vector<4x32xf32>
      %25 = vector.broadcast %16 : vector<4x1xf32> to vector<4x32xf32>
      %26 = arith.mulf %24, %25 : vector<4x32xf32>
      %c0_22 = arith.constant 0 : index
      %c0_23 = arith.constant 0 : index
      %c0_24 = arith.constant 0 : index
      %27 = vector.load %arg7[%c0_22, %c0_23, %c0_24] : memref<4x1x32xf32, #tpu.memory_space<vmem>>, vector<4x1x32xf32>
      %28 = vector.shape_cast %27 : vector<4x1x32xf32> to vector<4x32xf32>
      %29 = vector.broadcast %18 : vector<4x1xf32> to vector<4x32xf32>
      %30 = arith.mulf %28, %29 : vector<4x32xf32>
      %cst_25 = arith.constant dense<0.000000e+00> : vector<4xf32>
      %31 = vector.multi_reduction <add>, %26, %cst_25 [1] : vector<4x32xf32> to vector<4xf32>
      %32 = vector.shape_cast %31 : vector<4xf32> to vector<4x1xf32>
      %cst_26 = arith.constant 3.200000e+01 : f32
      %33 = vector.broadcast %cst_26 : f32 to vector<4x1xf32>
      %34 = arith.divf %32, %33 : vector<4x1xf32>
      %35 = vector.broadcast %34 : vector<4x1xf32> to vector<4x32xf32>
      %36 = arith.subf %26, %35 : vector<4x32xf32>
      %37 = arith.mulf %36, %36 : vector<4x32xf32>
      %cst_27 = arith.constant dense<0.000000e+00> : vector<4xf32>
      %38 = vector.multi_reduction <add>, %37, %cst_27 [1] : vector<4x32xf32> to vector<4xf32>
      %39 = vector.shape_cast %38 : vector<4xf32> to vector<4x1xf32>
      %cst_28 = arith.constant 3.200000e+01 : f32
      %40 = vector.broadcast %cst_28 : f32 to vector<4x1xf32>
      %41 = arith.divf %39, %40 : vector<4x1xf32>
      %cst_29 = arith.constant 9.99999974E-6 : f32
      %42 = vector.broadcast %cst_29 : f32 to vector<4x1xf32>
      %43 = arith.addf %41, %42 : vector<4x1xf32>
      %44 = math.rsqrt %43 : vector<4x1xf32>
      %45 = vector.broadcast %44 : vector<4x1xf32> to vector<4x32xf32>
      %46 = arith.mulf %36, %45 : vector<4x32xf32>
      %cst_30 = arith.constant dense<0.000000e+00> : vector<4xf32>
      %47 = vector.multi_reduction <add>, %30, %cst_30 [1] : vector<4x32xf32> to vector<4xf32>
      %48 = vector.shape_cast %47 : vector<4xf32> to vector<4x1xf32>
      %cst_31 = arith.constant 3.200000e+01 : f32
      %49 = vector.broadcast %cst_31 : f32 to vector<4x1xf32>
      %50 = arith.divf %48, %49 : vector<4x1xf32>
      %51 = vector.broadcast %50 : vector<4x1xf32> to vector<4x32xf32>
      %52 = arith.subf %30, %51 : vector<4x32xf32>
      %53 = arith.mulf %52, %52 : vector<4x32xf32>
      %cst_32 = arith.constant dense<0.000000e+00> : vector<4xf32>
      %54 = vector.multi_reduction <add>, %53, %cst_32 [1] : vector<4x32xf32> to vector<4xf32>
      %55 = vector.shape_cast %54 : vector<4xf32> to vector<4x1xf32>
      %cst_33 = arith.constant 3.200000e+01 : f32
      %56 = vector.broadcast %cst_33 : f32 to vector<4x1xf32>
      %57 = arith.divf %55, %56 : vector<4x1xf32>
      %cst_34 = arith.constant 9.99999974E-6 : f32
      %58 = vector.broadcast %cst_34 : f32 to vector<4x1xf32>
      %59 = arith.addf %57, %58 : vector<4x1xf32>
      %60 = math.rsqrt %59 : vector<4x1xf32>
      %61 = vector.broadcast %60 : vector<4x1xf32> to vector<4x32xf32>
      %62 = arith.mulf %52, %61 : vector<4x32xf32>
      %63 = tpu.concatenate %46, %62 in 1 : vector<4x32xf32>, vector<4x32xf32> -> vector<4x64xf32>
      %c0_35 = arith.constant 0 : index
      %c0_36 = arith.constant 0 : index
      %64 = vector.load %arg6[%c0_35, %c0_36] : memref<4x64xf32, #tpu.memory_space<vmem>>, vector<4x64xf32>
      tpu.vector_store %arg6[%c0_35, %c0_36], %63 {strides = array<i32>} : memref<4x64xf32, #tpu.memory_space<vmem>>, vector<4x64xf32>,
    } else {
    }
    return
  }
  func.func @transform_0(%arg0: i32, %arg1: i32) -> (i32, i32) {
    %c0_i32 = arith.constant 0 : i32
    %c0_i32_0 = arith.constant 0 : i32
    return %arg0, %c0_i32 : i32, i32
  }
  func.func @transform_1(%arg0: i32, %arg1: i32) -> (i32, i32, i32, i32) {
    %c0_i32 = arith.constant 0 : i32
    %c0_i32_0 = arith.constant 0 : i32
    %c0_i32_1 = arith.constant 0 : i32
    return %arg1, %arg0, %c0_i32, %c0_i32_0 : i32, i32, i32, i32
  }
  func.func @transform_2(%arg0: i32, %arg1: i32) -> (i32, i32, i32) {
    %c0_i32 = arith.constant 0 : i32
    %c0_i32_0 = arith.constant 0 : i32
    %c0_i32_1 = arith.constant 0 : i32
    return %c0_i32, %arg0, %c0_i32_0 : i32, i32, i32
  }
  func.func @transform_3(%arg0: i32, %arg1: i32) -> (i32, i32, i32) {
    %c0_i32 = arith.constant 0 : i32
    %c0_i32_0 = arith.constant 0 : i32
    return %arg0, %arg1, %c0_i32 : i32, i32, i32
  }
  func.func @transform_4(%arg0: i32, %arg1: i32) -> (i32, i32) {
    %c0_i32 = arith.constant 0 : i32
    %c0_i32_0 = arith.constant 0 : i32
    return %arg0, %c0_i32 : i32, i32
  }
}

</mosaic_0001>

<llo_original>
// kernel: tpu_custom_call.1
$region0: #{tpu_custom_call.1}
  #allocation0 [shape = 'u32[]', space=smem, size = 0x4, offset = 0x4, fixed_abs, tag = 'smem constant byte address 0x4 - core index']
  #allocation1 [shape = 'u32[72,128]{1,0:T(1,128)}', space=vmem, size = 0x9000, scoped, tag = 'internal scratch']
  #allocation2 [shape = 'f32[4,1,32]{2,1,0:T(1,128)}', space=vmem, size = 0x800, scoped, tag = 'scratch operand']
  %s0 = inlined_call_operand.vmem [shape: f32[4,8], index: 0, kind: input, shape index: {}]
  %s1 = inlined_call_operand.vmem [shape: f32[1,4,1,64], index: 1, kind: input, shape index: {}]
  %s2 = inlined_call_operand.vmem [shape: f32[8,4,32], index: 2, kind: input, shape index: {}]
  %s3 = inlined_call_operand.vmem [shape: f32[4,64,32], index: 3, kind: input, shape index: {}]
  %s4 = inlined_call_operand.hbm [shape: f32[4,64], index: 4, kind: output, shape index: {}]
  %s5 = sld [smem:[#allocation0]]
  $region34: #{tpu_custom_call.1} parent=0
    _
  %s7 = ssub.s32 1, %s5
  %s8 = scalar_select 0, %s7, %s5
  $region1: #{tpu_custom_call.1} parent=0
    #allocation3 [shape = 'u8[2048]{0}', space=vmem, size = 0x800, scoped, tag = 'output window, operand 0, single buffered']
    #allocation4 [shape = 's32[1]{0}', space=sflag, size = 0x4, scoped, tag = 'scoped memory for tpu_custom_call.1']
    %9 = vsyncpa [#allocation4], 0
    // Predicated region
    $region2: #{tpu_custom_call.1} parent=1 // pred_check
      _
    $region3: #{tpu_custom_call.1} parent=1 // pred_check_branch
      %11 = sbr.rel (0) target = $region5
    $region4: #{tpu_custom_call.1} parent=1 // pred_region
      _
    $region5: #{tpu_custom_call.1} parent=1 // pred_fallthru
      _
    // Predicated region
    $region6: #{tpu_custom_call.1} parent=1 // pred_check
      _
    $region7: #{tpu_custom_call.1} parent=1 // pred_check_branch
      %13 = sbr.rel (0) target = $region9
    $region8: #{tpu_custom_call.1} parent=1 // pred_region
      _
    $region9: #{tpu_custom_call.1} parent=1 // pred_fallthru
      _
    // Predicated region
    $region10: #{tpu_custom_call.1} parent=1 // pred_check
      _
    $region11: #{tpu_custom_call.1} parent=1 // pred_check_branch
      %15 = sbr.rel (0) target = $region13
    $region12: #{tpu_custom_call.1} parent=1 // pred_region
      _
    $region13: #{tpu_custom_call.1} parent=1 // pred_fallthru
      _
    // Predicated region
    $region14: #{tpu_custom_call.1} parent=1 // pred_check
      _
    $region15: #{tpu_custom_call.1} parent=1 // pred_check_branch
      %17 = sbr.rel (0) target = $region17
    $region16: #{tpu_custom_call.1} parent=1 // pred_region
      _
    $region17: #{tpu_custom_call.1} parent=1 // pred_fallthru
      _
    %p18 = scmp.eq.s32.totalorder 0, 0
    // Predicated region
    $region18: #{tpu_custom_call.1} parent=1 // pred_check
      %p19 = pneg %p18
    $region19: #{tpu_custom_call.1} parent=1 // pred_check_branch
      %21 = sbr.rel (%p19) target = $region21
    $region20: #{tpu_custom_call.1} parent=1 // pred_region
      %vm22 = vcmask 253952
      %23 = vst.msk [vmem:[#allocation2] sm:$0x1] %vm22, 0.0
      %24 = vst.msk [vmem:[#allocation2 + $0x1] sm:$0x1] %vm22, 0.0
      %25 = vst.msk [vmem:[#allocation2 + $0x2] sm:$0x1] %vm22, 0.0
      %26 = vst.msk [vmem:[#allocation2 + $0x3] sm:$0x1] %vm22, 0.0
    $region21: #{tpu_custom_call.1} parent=1 // pred_fallthru
      _
    %v27 = vld [vmem:[%s3] sm:$0xff]
    %v28 = vld [vmem:[%s3 + $0x8] sm:$0xff]
    %v29 = vld [vmem:[%s3 + $0x10] sm:$0xff]
    %v30 = vld [vmem:[%s3 + $0x18] sm:$0xff]
    %v31 = vld [vmem:[%s3 + $0x20] sm:$0xff]
    %v32 = vld [vmem:[%s3 + $0x28] sm:$0xff]
    %v33 = vld [vmem:[%s3 + $0x30] sm:$0xff]
    %v34 = vld [vmem:[%s3 + $0x38] sm:$0xff]
    %v35 = vld [vmem:[%s3 + $0x40] sm:$0xff]
    %v36 = vld [vmem:[%s3 + $0x48] sm:$0xff]
    %v37 = vld [vmem:[%s3 + $0x50] sm:$0xff]
    %v38 = vld [vmem:[%s3 + $0x58] sm:$0xff]
    %v39 = vld [vmem:[%s3 + $0x60] sm:$0xff]
    %v40 = vld [vmem:[%s3 + $0x68] sm:$0xff]
    %v41 = vld [vmem:[%s3 + $0x70] sm:$0xff]
    %v42 = vld [vmem:[%s3 + $0x78] sm:$0xff]
    %v43 = vld [vmem:[%s3 + $0x80] sm:$0xff]
    %v44 = vld [vmem:[%s3 + $0x88] sm:$0xff]
    %v45 = vld [vmem:[%s3 + $0x90] sm:$0xff]
    %v46 = vld [vmem:[%s3 + $0x98] sm:$0xff]
    %v47 = vld [vmem:[%s3 + $0xa0] sm:$0xff]
    %v48 = vld [vmem:[%s3 + $0xa8] sm:$0xff]
    %v49 = vld [vmem:[%s3 + $0xb0] sm:$0xff]
    %v50 = vld [vmem:[%s3 + $0xb8] sm:$0xff]
    %v51 = vld [vmem:[%s3 + $0xc0] sm:$0xff]
    %v52 = vld [vmem:[%s3 + $0xc8] sm:$0xff]
    %v53 = vld [vmem:[%s3 + $0xd0] sm:$0xff]
    %v54 = vld [vmem:[%s3 + $0xd8] sm:$0xff]
    %v55 = vld [vmem:[%s3 + $0xe0] sm:$0xff]
    %v56 = vld [vmem:[%s3 + $0xe8] sm:$0xff]
    %v57 = vld [vmem:[%s3 + $0xf0] sm:$0xff]
    %v58 = vld [vmem:[%s3 + $0xf8] sm:$0xff]
    %v59 = vld [vmem:[%s1] sm:$0x1]
    %v60 = vld [vmem:[%s1 + $0x1] sm:$0x1]
    %v61 = vld [vmem:[%s1 + $0x2] sm:$0x1]
    %v62 = vld [vmem:[%s1 + $0x3] sm:$0x1]
    %v63 = vld [vmem:[#allocation2] sm:$0x1]
    %v64 = vld [vmem:[#allocation2 + $0x1] sm:$0x1]
    %v65 = vld [vmem:[#allocation2 + $0x2] sm:$0x1]
    %v66 = vld [vmem:[#allocation2 + $0x3] sm:$0x1]
    %vm67 = vcmask 523264
    %v69 = vsel %vm67, %v59, 0
    %71 = vmatpush.msra.mxu0 0.0
    %72 = vmatpush.msra.mxu0 0.0
    %73 = vmatpush.msra.mxu0 0.0
    %74 = vmatpush.msra.mxu0 0.0
    %75 = vmatpush.msra.mxu0 0.0
    %76 = vmatpush.msra.mxu0 0.0
    %77 = vmatpush.msra.mxu0 0.0
    %78 = vmatpush.msra.mxu0 0.0
    %79 = vmatpush.msra.mxu0 %v34
    %80 = vmatpush.msra.mxu0 %v33
    %81 = vmatpush.msra.mxu0 %v32
    %82 = vmatpush.msra.mxu0 %v31
    %83 = vmatpush.msra.mxu0 %v30
    %84 = vmatpush.msra.mxu0 %v29
    %85 = vmatpush.msra.mxu0 %v28
    %86 = vmatpush.msra.mxu0 %v27
    %87 = vmatmul.f32.gmra.mxu0 %v69
    %v88 = vpop.f32.mrf.mxu0
    %v89 = vadd.f32 0.0, %v88
    %90 = vdwg.mxu0
    %v92 = vsel %vm67, %v60, 0
    %94 = vmatpush.msra.mxu0 0.0
    %95 = vmatpush.msra.mxu0 0.0
    %96 = vmatpush.msra.mxu0 0.0
    %97 = vmatpush.msra.mxu0 0.0
    %98 = vmatpush.msra.mxu0 0.0
    %99 = vmatpush.msra.mxu0 0.0
    %100 = vmatpush.msra.mxu0 0.0
    %101 = vmatpush.msra.mxu0 0.0
    %102 = vmatpush.msra.mxu0 %v42
    %103 = vmatpush.msra.mxu0 %v41
    %104 = vmatpush.msra.mxu0 %v40
    %105 = vmatpush.msra.mxu0 %v39
    %106 = vmatpush.msra.mxu0 %v38
    %107 = vmatpush.msra.mxu0 %v37
    %108 = vmatpush.msra.mxu0 %v36
    %109 = vmatpush.msra.mxu0 %v35
    %110 = vmatmul.f32.gmra.mxu0 %v92
    %v111 = vpop.f32.mrf.mxu0
    %v112 = vadd.f32 0.0, %v111
    %113 = vdwg.mxu0
    %v115 = vsel %vm67, %v61, 0
    %117 = vmatpush.msra.mxu0 0.0
    %118 = vmatpush.msra.mxu0 0.0
    %119 = vmatpush.msra.mxu0 0.0
    %120 = vmatpush.msra.mxu0 0.0
    %121 = vmatpush.msra.mxu0 0.0
    %122 = vmatpush.msra.mxu0 0.0
    %123 = vmatpush.msra.mxu0 0.0
    %124 = vmatpush.msra.mxu0 0.0
    %125 = vmatpush.msra.mxu0 %v50
    %126 = vmatpush.msra.mxu0 %v49
    %127 = vmatpush.msra.mxu0 %v48
    %128 = vmatpush.msra.mxu0 %v47
    %129 = vmatpush.msra.mxu0 %v46
    %130 = vmatpush.msra.mxu0 %v45
    %131 = vmatpush.msra.mxu0 %v44
    %132 = vmatpush.msra.mxu0 %v43
    %133 = vmatmul.f32.gmra.mxu0 %v115
    %v134 = vpop.f32.mrf.mxu0
    %v135 = vadd.f32 0.0, %v134
    %136 = vdwg.mxu0
    %v138 = vsel %vm67, %v62, 0
    %140 = vmatpush.msra.mxu0 0.0
    %141 = vmatpush.msra.mxu0 0.0
    %142 = vmatpush.msra.mxu0 0.0
    %143 = vmatpush.msra.mxu0 0.0
    %144 = vmatpush.msra.mxu0 0.0
    %145 = vmatpush.msra.mxu0 0.0
    %146 = vmatpush.msra.mxu0 0.0
    %147 = vmatpush.msra.mxu0 0.0
    %148 = vmatpush.msra.mxu0 %v58
    %149 = vmatpush.msra.mxu0 %v57
    %150 = vmatpush.msra.mxu0 %v56
    %151 = vmatpush.msra.mxu0 %v55
    %152 = vmatpush.msra.mxu0 %v54
    %153 = vmatpush.msra.mxu0 %v53
    %154 = vmatpush.msra.mxu0 %v52
    %155 = vmatpush.msra.mxu0 %v51
    %156 = vmatmul.f32.gmra.mxu0 %v138
    %v157 = vpop.f32.mrf.mxu0
    %v158 = vadd.f32 0.0, %v157
    %159 = vdwg.mxu0
    %v160 = vadd.f32 %v63, %v89
    %v161 = vadd.f32 %v64, %v112
    %v162 = vadd.f32 %v65, %v135
    %v163 = vadd.f32 %v66, %v158
    %vm164 = vcmask 253952
    %165 = vst.msk [vmem:[#allocation2] sm:$0x1] %vm164, %v160
    %166 = vst.msk [vmem:[#allocation2 + $0x1] sm:$0x1] %vm164, %v161
    %167 = vst.msk [vmem:[#allocation2 + $0x2] sm:$0x1] %vm164, %v162
    %168 = vst.msk [vmem:[#allocation2 + $0x3] sm:$0x1] %vm164, %v163
    // Predicated region
    $region22: #{tpu_custom_call.1} parent=1 // pred_check
      %p169 = pneg %p18
    $region23: #{tpu_custom_call.1} parent=1 // pred_check_branch
      %171 = sbr.rel (%p169) target = $region25
    $region24: #{tpu_custom_call.1} parent=1 // pred_region
      %v172 = vld [vmem:[%s0] sm:$0xf]
      %vm173 = vcmask 60416
      %v174 = vsel %vm173, %v172, 0.0
      %175 = vadd.xlane.f32.xlu0 %v174
      %v176 = vpop.xlane.xlu0 %175
      %v177 = vrcp.pop %v176
      %v178 = vmul.f32 %v176, %v176
      %v179 = vrcp.pop %v178
      %v180 = vld [vmem:[%s2] sm:$0xf]
      %v181 = vld [vmem:[%s2 + $0x4] sm:$0xf]
      %v182 = vld [vmem:[%s2 + $0x8] sm:$0xf]
      %v183 = vld [vmem:[%s2 + $0xc] sm:$0xf]
      %v184 = vld [vmem:[%s2 + $0x10] sm:$0xf]
      %v185 = vld [vmem:[%s2 + $0x14] sm:$0xf]
      %v186 = vld [vmem:[%s2 + $0x18] sm:$0xf]
      %v187 = vld [vmem:[%s2 + $0x1c] sm:$0xf]
      %188 = vxpose.xlu0.b32.start [1/16] %v172, 128
      %189 = vxpose.xlu0.b32.cont [2/16] 0.0, 128
      %190 = vxpose.xlu0.b32.cont [3/16] 0.0, 128
      %191 = vxpose.xlu0.b32.cont [4/16] 0.0, 128
      %192 = vxpose.xlu0.b32.cont [5/16] 0.0, 128
      %193 = vxpose.xlu0.b32.cont [6/16] 0.0, 128
      %194 = vxpose.xlu0.b32.cont [7/16] 0.0, 128
      %195 = vxpose.xlu0.b32.cont [8/16] 0.0, 128
      %196 = vxpose.xlu0.b32.cont [9/16] 0.0, 128
      %197 = vxpose.xlu0.b32.cont [10/16] 0.0, 128
      %198 = vxpose.xlu0.b32.cont [11/16] 0.0, 128
      %199 = vxpose.xlu0.b32.cont [12/16] 0.0, 128
      %200 = vxpose.xlu0.b32.cont [13/16] 0.0, 128
      %201 = vxpose.xlu0.b32.cont [14/16] 0.0, 128
      %202 = vxpose.xlu0.b32.cont [15/16] 0.0, 128
      %203 = vxpose.xlu0.b32.end [16/16] 0.0, 128
      %v204 = vpop.trf.xlu0
      %v205 = vpop.trf.xlu0
      %v206 = vpop.trf.xlu0
      %v207 = vpop.trf.xlu0
      %v208 = vpop.trf.xlu0
      %v209 = vpop.trf.xlu0
      %v210 = vpop.trf.xlu0
      %v211 = vpop.trf.xlu0
      %v212 = vpop.trf.xlu0
      %v213 = vpop.trf.xlu0
      %v214 = vpop.trf.xlu0
      %v215 = vpop.trf.xlu0
      %v216 = vpop.trf.xlu0
      %v217 = vpop.trf.xlu0
      %v218 = vpop.trf.xlu0
      %v219 = vpop.trf.xlu0
      %v220 = vperm.slane %v204, 0
      %v221 = vlaneseq
      %v222 = vshrl.u32 %v221, 7
      %224 = vset.pattern.permute.xlu0 %v222
      %225 = vperm.xlu0 %224, %v220
      %v226 = vpop.permute.xlu0 %225
      %v227 = vperm.slane %v204, 1
      %v228 = vlaneseq
      %v229 = vshrl.u32 %v228, 7
      %231 = vset.pattern.permute.xlu0 %v229
      %232 = vperm.xlu0 %231, %v227
      %v233 = vpop.permute.xlu0 %232
      %v234 = vperm.slane %v204, 2
      %v235 = vlaneseq
      %v236 = vshrl.u32 %v235, 7
      %238 = vset.pattern.permute.xlu0 %v236
      %239 = vperm.xlu0 %238, %v234
      %v240 = vpop.permute.xlu0 %239
      %v241 = vperm.slane %v204, 3
      %v242 = vlaneseq
      %v243 = vshrl.u32 %v242, 7
      %245 = vset.pattern.permute.xlu0 %v243
      %246 = vperm.xlu0 %245, %v241
      %v247 = vpop.permute.xlu0 %246
      %v248 = vperm.slane %v204, 4
      %v249 = vlaneseq
      %v250 = vshrl.u32 %v249, 7
      %252 = vset.pattern.permute.xlu0 %v250
      %253 = vperm.xlu0 %252, %v248
      %v254 = vpop.permute.xlu0 %253
      %v255 = vperm.slane %v204, 5
      %v256 = vlaneseq
      %v257 = vshrl.u32 %v256, 7
      %259 = vset.pattern.permute.xlu0 %v257
      %260 = vperm.xlu0 %259, %v255
      %v261 = vpop.permute.xlu0 %260
      %v262 = vperm.slane %v204, 6
      %v263 = vlaneseq
      %v264 = vshrl.u32 %v263, 7
      %266 = vset.pattern.permute.xlu0 %v264
      %267 = vperm.xlu0 %266, %v262
      %v268 = vpop.permute.xlu0 %267
      %v269 = vperm.slane %v204, 7
      %v270 = vlaneseq
      %v271 = vshrl.u32 %v270, 7
      %273 = vset.pattern.permute.xlu0 %v271
      %274 = vperm.xlu0 %273, %v269
      %v275 = vpop.permute.xlu0 %274
      %v276 = vmul.f32 %v180, %v226
      %v277 = vmul.f32 %v181, %v233
      %v278 = vmul.f32 %v182, %v240
      %v279 = vmul.f32 %v183, %v247
      %v280 = vmul.f32 %v184, %v254
      %v281 = vmul.f32 %v185, %v261
      %v282 = vmul.f32 %v186, %v268
      %v283 = vmul.f32 %v187, %v275
      %vm284 = vcmask 257024
      %v285 = vsel %vm284, %v276, 0.0
      %v286 = vsel %vm284, %v277, 0.0
      %v287 = vadd.f32 %v285, %v286
      %v288 = vsel %vm284, %v278, 0.0
      %v289 = vadd.f32 %v287, %v288
      %v290 = vsel %vm284, %v279, 0.0
      %v291 = vadd.f32 %v289, %v290
      %v292 = vsel %vm284, %v280, 0.0
      %v293 = vadd.f32 %v291, %v292
      %v294 = vsel %vm284, %v281, 0.0
      %v295 = vadd.f32 %v293, %v294
      %v296 = vsel %vm284, %v282, 0.0
      %v297 = vadd.f32 %v295, %v296
      %v298 = vsel %vm284, %v283, 0.0
      %v299 = vadd.f32 %v297, %v298
      %v300 = vmul.f32 %v299, %v177
      %v301 = vld [vmem:[#allocation2] sm:$0x1]
      %v302 = vld [vmem:[#allocation2 + $0x1] sm:$0x1]
      %v303 = vld [vmem:[#allocation2 + $0x2] sm:$0x1]
      %v304 = vld [vmem:[#allocation2 + $0x3] sm:$0x1]
      %v306 = vperm.slane %v179, 0
      %v307 = vperm.slane %v179, 1
      %v308 = vperm.slane %v179, 2
      %v309 = vperm.slane %v179, 3
      %v314 = vmul.f32 %v301, %v306
      %v315 = vmul.f32 %v302, %v307
      %v316 = vmul.f32 %v303, %v308
      %v317 = vmul.f32 %v304, %v309
      %v318 = vsel %vm284, %v300, 0.0
      %319 = vadd.xlane.f32.xlu0 %v318
      %v320 = vpop.xlane.xlu0 %319
      %v321 = vrcp.pop 32.0
      %v322 = vmul.f32 32.0, %v321
      %v323 = vsub.f32 1.0, %v322
      %v324 = vmul.f32 %v321, %v323
      %v325 = vadd.f32 %v321, %v324
      %vm326 = vweird.f32 %v321
      %v327 = vsel %vm326, %v321, %v325
      %v328 = vmul.f32 %v320, %v327
      %v329 = vsub.f32 %v300, %v328
      %v330 = vmul.f32 %v329, %v329
      %v331 = vsel %vm284, %v330, 0.0
      %332 = vadd.xlane.f32.xlu0 %v331
      %v333 = vpop.xlane.xlu0 %332
      %v334 = vmul.f32 %v333, %v327
      %v335 = vadd.f32 %v334, 1e-05
      %v336 = vrsqrt.pop %v335
      %v337 = vmul.f32 %v336, %v335
      %v338 = vmul.f32 %v337, %v336
      %v339 = vmul.f32 0.5, %v338
      %v340 = vsub.f32 1.5, %v339
      %v341 = vmul.f32 %v336, %v340
      %vm342 = vweird.f32 %v335
      %vm343 = vweird.f32 %v336
      %vm344 = vmor %vm342, %vm343
      %v345 = vsel %vm344, %v336, %v341
      %v346 = vmul.f32 %v329, %v345
      %351 = vst [vmem:[#allocation1] ss:$9 sm:$0xff] %v314
      %s352 = scalar_lea.vmem [#allocation1], 1
      %353 = vst [vmem:[%s352] ss:$9 sm:$0xff] %v315
      %s354 = scalar_lea.vmem [#allocation1], 2
      %355 = vst [vmem:[%s354] ss:$9 sm:$0xff] %v316
      %s356 = scalar_lea.vmem [#allocation1], 3
      %357 = vst [vmem:[%s356] ss:$9 sm:$0xff] %v317
      %v358 = vld [vmem:[#allocation1] sm:$0xff]
      %v360 = vsel %vm284, %v358, 0.0
      %361 = vadd.xlane.f32.xlu0 %v360
      %v362 = vpop.xlane.xlu0 %361
      %v363 = vmul.f32 %v362, %v327
      %v365 = vperm.slane %v363, 0
      %v366 = vperm.slane %v363, 1
      %v367 = vperm.slane %v363, 2
      %v368 = vperm.slane %v363, 3
      %v373 = vsub.f32 %v314, %v365
      %v374 = vsub.f32 %v315, %v366
      %v375 = vsub.f32 %v316, %v367
      %v376 = vsub.f32 %v317, %v368
      %v377 = vmul.f32 %v373, %v373
      %v378 = vmul.f32 %v374, %v374
      %v379 = vmul.f32 %v375, %v375
      %v380 = vmul.f32 %v376, %v376
      %385 = vst [vmem:[#allocation1] ss:$9 sm:$0xff] %v377
      %s386 = scalar_lea.vmem [#allocation1], 1
      %387 = vst [vmem:[%s386] ss:$9 sm:$0xff] %v378
      %s388 = scalar_lea.vmem [#allocation1], 2
      %389 = vst [vmem:[%s388] ss:$9 sm:$0xff] %v379
      %s390 = scalar_lea.vmem [#allocation1], 3
      %391 = vst [vmem:[%s390] ss:$9 sm:$0xff] %v380
      %v392 = vld [vmem:[#allocation1] sm:$0xff]
      %v394 = vsel %vm284, %v392, 0.0
      %395 = vadd.xlane.f32.xlu0 %v394
      %v396 = vpop.xlane.xlu0 %395
      %v397 = vmul.f32 %v396, %v327
      %v398 = vadd.f32 %v397, 1e-05
      %v399 = vrsqrt.pop %v398
      %v400 = vmul.f32 %v399, %v398
      %v401 = vmul.f32 %v400, %v399
      %v402 = vmul.f32 0.5, %v401
      %v403 = vsub.f32 1.5, %v402
      %v404 = vmul.f32 %v399, %v403
      %vm405 = vweird.f32 %v398
      %vm406 = vweird.f32 %v399
      %vm407 = vmor %vm405, %vm406
      %v408 = vsel %vm407, %v399, %v404
      %v410 = vperm.slane %v408, 0
      %v411 = vperm.slane %v408, 1
      %v412 = vperm.slane %v408, 2
      %v413 = vperm.slane %v408, 3
      %v418 = vmul.f32 %v373, %v410
      %v419 = vmul.f32 %v374, %v411
      %v420 = vmul.f32 %v375, %v412
      %v421 = vmul.f32 %v376, %v413
      %426 = vst [vmem:[#allocation1] ss:$9 sm:$0xff] %v418
      %s427 = scalar_lea.vmem [#allocation1], 1
      %428 = vst [vmem:[%s427] ss:$9 sm:$0xff] %v419
      %s429 = scalar_lea.vmem [#allocation1], 2
      %430 = vst [vmem:[%s429] ss:$9 sm:$0xff] %v420
      %s431 = scalar_lea.vmem [#allocation1], 3
      %432 = vst [vmem:[%s431] ss:$9 sm:$0xff] %v421
      %v433 = vld [vmem:[#allocation1] sm:$0xff]
      %434 = vrot.lane.b32.xlu0 %v433, 32
      %v435 = vpop.permute.xlu0 %434
      %vm437 = vcmask 261120
      %v438 = vsel %vm437, %v346, %v435
      %vm439 = vcmask 519168
      %440 = vst.msk [vmem:[#allocation3] sm:$0xf] %vm439, %v438
    $region25: #{tpu_custom_call.1} parent=1 // pred_fallthru
      _
    // Predicated region
    $region26: #{tpu_custom_call.1} parent=1 // pred_check
      _
    $region27: #{tpu_custom_call.1} parent=1 // pred_check_branch
      %442 = sbr.rel (0) target = $region29
    $region28: #{tpu_custom_call.1} parent=1 // pred_region
      %444 = vsyncadd [#allocation4], 0
      %s446 = sshll.u32 [#allocation3], 4
      %s447 = int_to_ptr.vmem [resolvable:$true] %s446
      %s448 = sshll.u32 %s4, 4
      %s449 = int_to_ptr.hbm [resolvable:$true] %s448
      %451 = dma.vmem_to_hbm [thread:$0]  %s447, 64, %s449, [#allocation4]
    $region29: #{tpu_custom_call.1} parent=1 // pred_fallthru
      _
    // Predicated region
    $region30: #{tpu_custom_call.1} parent=1 // pred_check
      _
    $region31: #{tpu_custom_call.1} parent=1 // pred_check_branch
      %453 = sbr.rel (0) target = $region33
    $region32: #{tpu_custom_call.1} parent=1 // pred_region
      %455 = dma.done [#allocation4], 64
    $region33: #{tpu_custom_call.1} parent=1 // pred_fallthru
      _
    %456 = vsyncpa [#allocation4], 1

</llo_original>
